<compile_context>
chip_gen: v5e
topology: v5e:2x2
jax: 0.10.0
libtpu: 0.0.40
codegen_flags: <defaults>
</compile_context>

<pallas_src>
import functools
import math

import jax
import jax.numpy as jnp
from jax.experimental import pallas as pl
from jax.experimental.pallas import tpu as pltpu


# ----------------------------------------------------------------------------
# pe table construction (same math as the PyTorch __init__); kept in f32.
# ----------------------------------------------------------------------------
def make_positional_encoding(d_model: int, max_len: int) -> jnp.ndarray:
    position = jnp.arange(max_len, dtype=jnp.float32)[:, None]            # (max_len, 1)
    div_term = jnp.exp(jnp.arange(0, d_model, 2, dtype=jnp.float32)
                       * (-math.log(10000.0) / d_model))                  # (d_model/2,)
    angles = position * div_term                                          # (max_len, d_model/2)
    pe = jnp.zeros((max_len, d_model), dtype=jnp.float32)
    pe = pe.at[:, 0::2].set(jnp.sin(angles))
    pe = pe.at[:, 1::2].set(jnp.cos(angles))
    return pe


# ----------------------------------------------------------------------------
# kernels
# ----------------------------------------------------------------------------
def _add_pe_seq_tiled_kernel(x_ref, pe_ref, o_ref):
    # x_ref/o_ref: (ts, d_model) (batch dim squeezed); pe_ref: (ts, d_model) f32.
    # Add in f32 (matches PyTorch promotion), store in the activation dtype.
    o_ref[...] = (x_ref[...].astype(jnp.float32) + pe_ref[...]).astype(o_ref.dtype)


def _add_pe_batched_kernel(seq_len, x_ref, pe_ref, o_ref):
    # x_ref/o_ref: (tb, seq_len, d_model); pe_ref: (pe_rows >= seq_len, d_model) f32.
    pe = pe_ref[:seq_len, :]  # static slice drops any 8-row alignment padding
    o_ref[...] = (x_ref[...].astype(jnp.float32) + pe[None, :, :]).astype(o_ref.dtype)


# ----------------------------------------------------------------------------
# block-size policy
# ----------------------------------------------------------------------------
def _default_target_block_bytes() -> int:
    # v5e's scoped-VMEM default is only 16 MiB -> stay at 2 MiB blocks there.
    # v6e/v7x (32 MiB scoped default) comfortably fit 4 MiB blocks with
    # x/out double-buffered plus a resident pe tile.
    try:
        kind = jax.devices()[0].device_kind.lower()
    except Exception:
        return 2 << 20
    if "v5e" in kind or "v5 lite" in kind or "v5lite" in kind:
        return 2 << 20
    return 4 << 20


# ----------------------------------------------------------------------------
# forward
# ----------------------------------------------------------------------------
def positional_encoding_forward(x: jnp.ndarray,
                                pe: jnp.ndarray,
                                *,
                                target_block_bytes: int | None = None,
                                donate_x: bool = False) -> jnp.ndarray:
    """x: (batch, seq_len, d_model); pe: (max_len, d_model) float32."""
    batch, seq_len, d_model = x.shape
    max_len = pe.shape[0]
    if seq_len > max_len:
        raise ValueError(f"seq_len {seq_len} exceeds max_len {max_len}")

    itemsize = jnp.dtype(x.dtype).itemsize
    if target_block_bytes is None:
        target_block_bytes = _default_target_block_bytes()

    sublane = max(8, 32 // itemsize)           # 8 for f32, 16 for bf16
    row_bytes = d_model * itemsize
    io_aliases = {0: 0} if donate_x else {}    # only useful if caller donates x

    # Largest sublane-aligned number of seq rows under the byte target.
    rows = max(sublane,
               (max(1, target_block_bytes // row_bytes) // sublane) * sublane)

    out_shape = jax.ShapeDtypeStruct((batch, seq_len, d_model), x.dtype)

    # TODO(synk): if d_model is not a multiple of 128 (not the case for this
    # module, d_model=512), reshape blocks to a lane-dense (rows*d_model/128, 128)
    # view to avoid masked partial stores.
    # TODO(synk): for batch == 1, pe could be generated in-kernel from iota +
    # sin/cos (free EUP work) to drop its HBM read entirely.

    if seq_len > rows:
        # ---- Path A: tile the sequence dimension; partial edge block is OK ----
        ts = rows
        grid = (pl.cdiv(seq_len, ts), batch)   # seq outer, batch inner:
        # pe's block index depends only on the outer axis, so it stays resident
        # in VMEM across the inner batch loop.
        return pl.pallas_call(
            _add_pe_seq_tiled_kernel,
            out_shape=out_shape,
            grid=grid,
            in_specs=[
                pl.BlockSpec((pl.Squeezed(), ts, d_model), lambda s, b: (b, s, 0)),
                pl.BlockSpec((ts, d_model), lambda s, b: (s, 0)),
            ],
            out_specs=pl.BlockSpec((pl.Squeezed(), ts, d_model), lambda s, b: (b, s, 0)),
            compiler_params=pltpu.CompilerParams(
                dimension_semantics=("parallel", "parallel")),
            input_output_aliases=io_aliases,
        )(x, pe)

    # ---- Path B: whole sequence per block, fold a batch tile into the block ----
    tb = max(1, min(batch, target_block_bytes // max(1, seq_len * row_bytes)))
    grid = (pl.cdiv(batch, tb),)
    # pe block rows must be a multiple of 8 or the full pe extent; read only
    # the first seq_len rows inside the kernel.
    pe_rows = min(max_len, ((seq_len + 7) // 8) * 8)

    return pl.pallas_call(
        functools.partial(_add_pe_batched_kernel, seq_len),
        out_shape=out_shape,
        grid=grid,
        in_specs=[
            pl.BlockSpec((tb, seq_len, d_model), lambda i: (i, 0, 0)),
            pl.BlockSpec((pe_rows, d_model), lambda i: (0, 0)),   # constant -> resident
        ],
        out_specs=pl.BlockSpec((tb, seq_len, d_model), lambda i: (i, 0, 0)),
        compiler_params=pltpu.CompilerParams(dimension_semantics=("parallel",)),
        input_output_aliases=io_aliases,
    )(x, pe)


# ----------------------------------------------------------------------------
# self-test
# ----------------------------------------------------------------------------
if __name__ == "__main__":
    key = jax.random.PRNGKey(0)
    k1, k2, k3 = jax.random.split(key, 3)

    D = 512  # d_model from the PyTorch spec

    # Case 1: tiny shapes -> batched path, single block (no pipeline).
    b1, s1, ml1 = 2, 8, 16
    x1 = jax.random.normal(k1, (b1, s1, D), dtype=jnp.float32)
    pe1 = make_positional_encoding(D, ml1)
    out1 = jax.block_until_ready(positional_encoding_forward(x1, pe1))
    ref1 = x1 + pe1[:s1, :][None, :, :]
    assert jnp.allclose(out1, ref1, atol=1e-6), "mismatch (batched path)"

    # Case 2: seq_len not a multiple of 8 -> padded pe block, in-kernel slice.
    b2, s2, ml2 = 3, 12, 16
    x2 = jax.random.normal(k2, (b2, s2, D), dtype=jnp.float32)
    pe2 = make_positional_encoding(D, ml2)
    out2 = jax.block_until_ready(positional_encoding_forward(x2, pe2))
    ref2 = x2 + pe2[:s2, :][None, :, :]
    assert jnp.allclose(out2, ref2, atol=1e-6), "mismatch (padded-pe path)"

    # Case 3: force the seq-tiled path (tiny byte target keeps shapes small)
    # including a partial edge block along seq.
    b3, s3, ml3 = 2, 72, 128
    x3 = jax.random.normal(k3, (b3, s3, D), dtype=jnp.float32)
    pe3 = make_positional_encoding(D, ml3)
    out3 = jax.block_until_ready(
        positional_encoding_forward(x3, pe3, target_block_bytes=64 << 10))
    ref3 = x3 + pe3[:s3, :][None, :, :]
    assert jnp.allclose(out3, ref3, atol=1e-6), "mismatch (seq-tiled path)"

    print("KERNEL_OK")
</pallas_src>

<mosaic_0001>
module attributes {stable_mosaic.version = 11 : i64} {
  func.func @_add_pe_batched_kernel(%arg0: i32, %arg1: memref<2x8x512xf32, #tpu.memory_space<vmem>>, %arg2: memref<8x512xf32, #tpu.memory_space<vmem>>, %arg3: memref<2x8x512xf32, #tpu.memory_space<vmem>>) attributes {dimension_semantics = [#tpu.dimension_semantics<parallel>], iteration_bounds = array<i64: 1>, scalar_prefetch = 0 : i64, scratch_operands = 0 : i64, tpu.core_type = #tpu.core_type<tc>, window_params = [{transform_indices = @transform_0, window_bounds = array<i64: 2, 8, 512>}, {transform_indices = @transform_1, window_bounds = array<i64: 8, 512>}, {transform_indices = @transform_2, window_bounds = array<i64: 2, 8, 512>}]} {
    %c0 = arith.constant 0 : index
    %c0_0 = arith.constant 0 : index
    %0 = vector.load %arg2[%c0, %c0_0] : memref<8x512xf32, #tpu.memory_space<vmem>>, vector<8x512xf32>
    %c0_1 = arith.constant 0 : index
    %c0_2 = arith.constant 0 : index
    %c0_3 = arith.constant 0 : index
    %1 = vector.load %arg1[%c0_1, %c0_2, %c0_3] : memref<2x8x512xf32, #tpu.memory_space<vmem>>, vector<2x8x512xf32>
    %2 = vector.shape_cast %0 : vector<8x512xf32> to vector<1x8x512xf32>
    %3 = vector.broadcast %2 : vector<1x8x512xf32> to vector<2x8x512xf32>
    %4 = arith.addf %1, %3 : vector<2x8x512xf32>
    %c0_4 = arith.constant 0 : index
    %c0_5 = arith.constant 0 : index
    %c0_6 = arith.constant 0 : index
    %5 = vector.load %arg3[%c0_4, %c0_5, %c0_6] : memref<2x8x512xf32, #tpu.memory_space<vmem>>, vector<2x8x512xf32>
    tpu.vector_store %arg3[%c0_4, %c0_5, %c0_6], %4 {strides = array<i32>} : memref<2x8x512xf32, #tpu.memory_space<vmem>>, vector<2x8x512xf32>,
    return
  }
  func.func @transform_0(%arg0: i32) -> (i32, i32, i32) {
    %c0_i32 = arith.constant 0 : i32
    %c0_i32_0 = arith.constant 0 : i32
    %c0_i32_1 = arith.constant 0 : i32
    return %arg0, %c0_i32, %c0_i32_0 : i32, i32, i32
  }
  func.func @transform_1(%arg0: i32) -> (i32, i32) {
    %c0_i32 = arith.constant 0 : i32
    %c0_i32_0 = arith.constant 0 : i32
    %c0_i32_1 = arith.constant 0 : i32
    return %c0_i32, %c0_i32_0 : i32, i32
  }
  func.func @transform_2(%arg0: i32) -> (i32, i32, i32) {
    %c0_i32 = arith.constant 0 : i32
    %c0_i32_0 = arith.constant 0 : i32
    %c0_i32_1 = arith.constant 0 : i32
    return %arg0, %c0_i32, %c0_i32_0 : i32, i32, i32
  }
}

</mosaic_0001>

<llo_original>
// kernel: tpu_custom_call.1
$region0: #{tpu_custom_call.1}
  #allocation0 [shape = 'u32[]', space=smem, size = 0x4, offset = 0x4, fixed_abs, tag = 'smem constant byte address 0x4 - core index']
  #allocation1 [shape = 'u32[72,128]{1,0:T(1,128)}', space=vmem, size = 0x9000, scoped, tag = 'internal scratch']
  %s0 = inlined_call_operand.hbm [shape: f32[2,8,512], index: 0, kind: input, shape index: {}]
  %s1 = inlined_call_operand.hbm [shape: f32[16,512], index: 1, kind: input, shape index: {}]
  %s2 = inlined_call_operand.hbm [shape: f32[2,8,512], index: 2, kind: output, shape index: {}]
  %s3 = sld [smem:[#allocation0]]
  $region26: #{tpu_custom_call.1} parent=0
    _
  %s5 = ssub.s32 1, %s3
  %s6 = scalar_select 0, %s5, %s3
  $region1: #{tpu_custom_call.1} parent=0
    #allocation2 [shape = 'u8[32768]{0}', space=vmem, size = 0x8000, scoped, tag = 'input window, operand 0, single buffered']
    #allocation3 [shape = 's32[1]{0}', space=sflag, size = 0x4, scoped, tag = 'scoped memory for tpu_custom_call.1']
    #allocation4 [shape = 's32[1]{0}', space=sflag, size = 0x4, scoped, tag = 'scoped memory for tpu_custom_call.1']
    #allocation5 [shape = 'u8[16384]{0}', space=vmem, size = 0x4000, scoped, tag = 'input window, operand 1, single buffered']
    #allocation6 [shape = 's32[1]{0}', space=sflag, size = 0x4, scoped, tag = 'scoped memory for tpu_custom_call.1']
    #allocation7 [shape = 'u8[32768]{0}', space=vmem, size = 0x8000, scoped, tag = 'output window, operand 0, single buffered']
    %7 = vsyncpa [#allocation3], 0
    %8 = vsyncpa [#allocation6], 0
    %9 = vsyncpa [#allocation4], 0
    // Predicated region
    $region2: #{tpu_custom_call.1} parent=1 // pred_check
      _
    $region3: #{tpu_custom_call.1} parent=1 // pred_check_branch
      %11 = sbr.rel (0) target = $region5
    $region4: #{tpu_custom_call.1} parent=1 // pred_region
      %13 = vsyncadd [#allocation3], 0
      %s14 = sshll.u32 %s0, 4
      %s15 = int_to_ptr.hbm [resolvable:$true] %s14
      %s16 = sshll.u32 [#allocation2], 4
      %s17 = int_to_ptr.vmem [resolvable:$true] %s16
      %22 = dma.hbm_to_vmem [thread:$0]  %s15, 1024, %s17, [#allocation3], 512, 512, 32
    $region5: #{tpu_custom_call.1} parent=1 // pred_fallthru
      _
    // Predicated region
    $region6: #{tpu_custom_call.1} parent=1 // pred_check
      _
    $region7: #{tpu_custom_call.1} parent=1 // pred_check_branch
      %24 = sbr.rel (0) target = $region9
    $region8: #{tpu_custom_call.1} parent=1 // pred_region
      %26 = vsyncadd [#allocation6], 0
      %s28 = sshll.u32 %s1, 4
      %s29 = int_to_ptr.hbm [resolvable:$true] %s28
      %s30 = sshll.u32 [#allocation5], 4
      %s31 = int_to_ptr.vmem [resolvable:$true] %s30
      %33 = dma.hbm_to_vmem [thread:$0]  %s29, 512, %s31, [#allocation6]
    $region9: #{tpu_custom_call.1} parent=1 // pred_fallthru
      _
    // Predicated region
    $region10: #{tpu_custom_call.1} parent=1 // pred_check
      _
    $region11: #{tpu_custom_call.1} parent=1 // pred_check_branch
      %35 = sbr.rel (0) target = $region13
    $region12: #{tpu_custom_call.1} parent=1 // pred_region
      %37 = dma.done [#allocation3], 1024
    $region13: #{tpu_custom_call.1} parent=1 // pred_fallthru
      _
    // Predicated region
    $region14: #{tpu_custom_call.1} parent=1 // pred_check
      _
    $region15: #{tpu_custom_call.1} parent=1 // pred_check_branch
      %39 = sbr.rel (0) target = $region17
    $region16: #{tpu_custom_call.1} parent=1 // pred_region
      %41 = dma.done [#allocation6], 512
    $region17: #{tpu_custom_call.1} parent=1 // pred_fallthru
      _
    %v42 = vld [vmem:[#allocation5] sm:$0xff]
    %v43 = vld [vmem:[#allocation5 + $0x8] sm:$0xff]
    %v44 = vld [vmem:[#allocation5 + $0x10] sm:$0xff]
    %v45 = vld [vmem:[#allocation5 + $0x18] sm:$0xff]
    %v46 = vld [vmem:[#allocation2] sm:$0xff]
    %v47 = vld [vmem:[#allocation2 + $0x8] sm:$0xff]
    %v48 = vld [vmem:[#allocation2 + $0x10] sm:$0xff]
    %v49 = vld [vmem:[#allocation2 + $0x18] sm:$0xff]
    %v50 = vld [vmem:[#allocation2 + $0x20] sm:$0xff]
    %v51 = vld [vmem:[#allocation2 + $0x28] sm:$0xff]
    %v52 = vld [vmem:[#allocation2 + $0x30] sm:$0xff]
    %v53 = vld [vmem:[#allocation2 + $0x38] sm:$0xff]
    %v54 = vadd.f32 %v46, %v42
    %v55 = vadd.f32 %v47, %v43
    %v56 = vadd.f32 %v48, %v44
    %v57 = vadd.f32 %v49, %v45
    %v58 = vadd.f32 %v50, %v42
    %v59 = vadd.f32 %v51, %v43
    %v60 = vadd.f32 %v52, %v44
    %v61 = vadd.f32 %v53, %v45
    %62 = vst [vmem:[#allocation7] sm:$0xff] %v54
    %63 = vst [vmem:[#allocation7 + $0x8] sm:$0xff] %v55
    %64 = vst [vmem:[#allocation7 + $0x10] sm:$0xff] %v56
    %65 = vst [vmem:[#allocation7 + $0x18] sm:$0xff] %v57
    %66 = vst [vmem:[#allocation7 + $0x20] sm:$0xff] %v58
    %67 = vst [vmem:[#allocation7 + $0x28] sm:$0xff] %v59
    %68 = vst [vmem:[#allocation7 + $0x30] sm:$0xff] %v60
    %69 = vst [vmem:[#allocation7 + $0x38] sm:$0xff] %v61
    // Predicated region
    $region18: #{tpu_custom_call.1} parent=1 // pred_check
      _
    $region19: #{tpu_custom_call.1} parent=1 // pred_check_branch
      %71 = sbr.rel (0) target = $region21
    $region20: #{tpu_custom_call.1} parent=1 // pred_region
      %73 = vsyncadd [#allocation4], 0
      %s74 = sshll.u32 [#allocation7], 4
      %s75 = int_to_ptr.vmem [resolvable:$true] %s74
      %s76 = sshll.u32 %s2, 4
      %s77 = int_to_ptr.hbm [resolvable:$true] %s76
      %82 = dma.vmem_to_hbm [thread:$0]  %s75, 1024, %s77, [#allocation4], 512, 512, 32
    $region21: #{tpu_custom_call.1} parent=1 // pred_fallthru
      _
    // Predicated region
    $region22: #{tpu_custom_call.1} parent=1 // pred_check
      _
    $region23: #{tpu_custom_call.1} parent=1 // pred_check_branch
      %84 = sbr.rel (0) target = $region25
    $region24: #{tpu_custom_call.1} parent=1 // pred_region
      %86 = dma.done [#allocation4], 1024
    $region25: #{tpu_custom_call.1} parent=1 // pred_fallthru
      _
    %87 = vsyncpa [#allocation3], 1
    %88 = vsyncpa [#allocation6], 1
    %89 = vsyncpa [#allocation4], 1

</llo_original>
